<compile_context>
chip_gen: v7x
topology: tpu7x:2x2x1
jax: 0.10.0
libtpu: 0.0.40
codegen_flags: <defaults>
</compile_context>

<pallas_src>
import jax
import jax.numpy as jnp
from jax.experimental import pallas as pl
from jax.experimental.pallas import tpu as pltpu


# ---- problem sizes (small, consistent with the module) ----
B = 2           # batch
N = 8           # sequence length (tokens)
C = 32          # embedding dim
NUM_HEADS = 4   # heads (C divisible by heads)
HEAD_DIM = C // NUM_HEADS
BN = B * N
SCALE = HEAD_DIM ** (-0.5)
QKV_BIAS = False  # module default


def _attention_kernel(x_ref, wqkv_ref, wp_ref, b_ref, o_ref):
    """Whole problem in one invocation.

    x_ref    : (B*N, C)  f32   flattened tokens
    wqkv_ref : (C, 3C)   bf16  fused [Wq | Wk | Wv] (SCALE folded into Q cols)
    wp_ref   : (C, C)    bf16  output projection
    b_ref    : (1, C)    f32   output-projection bias
    o_ref    : (B*N, C)  f32
    """
    x = x_ref[...].astype(jnp.bfloat16)                                    # (BN, C)

    # One fused Q/K/V projection on the MXU (bf16 operands, f32 accumulation).
    qkv = jnp.dot(x, wqkv_ref[...], preferred_element_type=jnp.float32)    # (BN, 3C)

    # Per-(batch, head) attention core.  The B*H tiny (N, hd) score/context
    # matmul pairs are inherent to multi-head attention at this size; softmax
    # and all elementwise math stay in f32 (v5e has no bf16 VPU/EUP).
    batch_ctx = []
    for b in range(B):
        r0 = b * N
        head_ctx = []
        for h in range(NUM_HEADS):
            c0 = h * HEAD_DIM
            q = qkv[r0:r0 + N, 0 * C + c0:0 * C + c0 + HEAD_DIM].astype(jnp.bfloat16)
            k = qkv[r0:r0 + N, 1 * C + c0:1 * C + c0 + HEAD_DIM].astype(jnp.bfloat16)
            v = qkv[r0:r0 + N, 2 * C + c0:2 * C + c0 + HEAD_DIM].astype(jnp.bfloat16)
            # Scores (scale already folded into the Q weights) + stable softmax.
            s = jnp.einsum('qd,kd->qk', q, k,
                           preferred_element_type=jnp.float32)             # (N, N)
            s = s - jnp.max(s, axis=-1, keepdims=True)
            p = jnp.exp(s)
            p = p * pl.reciprocal(jnp.sum(p, axis=-1, keepdims=True), approx=False)
            ctx = jnp.dot(p.astype(jnp.bfloat16), v,
                          preferred_element_type=jnp.float32)              # (N, hd)
            head_ctx.append(ctx)
        # Concatenate heads onto lanes -> (N, C); this replaces torch's
        # transpose(1, 2).reshape(B, N, C) head merge.
        batch_ctx.append(jnp.concatenate(head_ctx, axis=-1))
    ctx_all = jnp.concatenate(batch_ctx, axis=0).astype(jnp.bfloat16)      # (BN, C)

    # One fused output projection + bias.
    y = jnp.dot(ctx_all, wp_ref[...], preferred_element_type=jnp.float32)  # (BN, C)
    o_ref[...] = (y + b_ref[...]).astype(o_ref.dtype)


def _cost_estimate():
    flops = (2 * BN * C * (3 * C)                            # fused qkv projection
             + 2 * B * NUM_HEADS * N * N * HEAD_DIM * 2      # q@k.T and p@v
             + 2 * BN * C * C)                               # output projection
    transcendentals = B * NUM_HEADS * N * N                  # exp
    bytes_accessed = (BN * C * 4                             # x in
                      + C * (3 * C) * 2                      # fused qkv weight (bf16)
                      + C * C * 2                            # proj weight (bf16)
                      + C * 4                                # bias
                      + BN * C * 4)                          # out
    return pl.CostEstimate(flops=flops, transcendentals=transcendentals,
                           bytes_accessed=bytes_accessed)


@jax.jit
def attention_pallas(x, wqkv_fused, wp, b2d):
    """x: (B, N, C) f32; weights prepared once by prepare_params()."""
    x2d = x.reshape(BN, C)                    # contiguous reshape: free in XLA
    vmem = pl.BlockSpec(memory_space=pltpu.MemorySpace.VMEM)
    y2d = pl.pallas_call(
        _attention_kernel,
        out_shape=jax.ShapeDtypeStruct((BN, C), x.dtype),
        in_specs=[vmem, vmem, vmem, vmem],
        out_specs=vmem,
        cost_estimate=_cost_estimate(),
    )(x2d, wqkv_fused, wp, b2d)
    return y2d.reshape(B, N, C)               # contiguous reshape: free in XLA


def prepare_params(w_qkv, w_proj, b_proj):
    """One-time parameter prep (outside the hot path).

    w_qkv  : (3C, C)  nn.Linear(dim, 3*dim, bias=False).weight
    w_proj : (C, C)   nn.Linear(dim, dim).weight
    b_proj : (C,)     nn.Linear(dim, dim).bias

    Produces a single fused (C, 3C) bf16 QKV weight (attention scale folded into
    the Q columns), a (C, C) bf16 projection weight and a (1, C) f32 bias — no
    per-head or per-batch replication.
    """
    w_qkv_t = jnp.asarray(w_qkv, jnp.float32).T              # (C, 3C), cols = [q|k|v]
    wqkv_fused = jnp.concatenate(
        [w_qkv_t[:, :C] * SCALE, w_qkv_t[:, C:]], axis=1).astype(jnp.bfloat16)
    wp = jnp.asarray(w_proj, jnp.float32).T.astype(jnp.bfloat16)   # (C, C)
    b2d = jnp.asarray(b_proj, jnp.float32).reshape(1, C)
    return wqkv_fused, wp, b2d


def attention_ref(x, w_qkv, w_proj, b_proj):
    """Pure-JAX f32 reference mirroring the PyTorch forward (eval mode)."""
    Bx, Nx, Cx = x.shape
    qkv = x @ w_qkv.T                                         # (B, N, 3C); qkv_bias=False
    qkv = qkv.reshape(Bx, Nx, 3, NUM_HEADS, Cx // NUM_HEADS).transpose(2, 0, 3, 1, 4)
    q, k, v = qkv[0], qkv[1], qkv[2]                          # (B, H, N, hd)
    attn = (q @ jnp.swapaxes(k, -1, -2)) * SCALE              # (B, H, N, N)
    attn = jax.nn.softmax(attn, axis=-1)
    out = attn @ v                                            # (B, H, N, hd)
    out = out.transpose(0, 2, 1, 3).reshape(Bx, Nx, Cx)
    return out @ w_proj.T + b_proj


if __name__ == "__main__":
    key = jax.random.PRNGKey(0)
    kx, kw1, kw2, kb = jax.random.split(key, 4)

    x = jax.random.normal(kx, (B, N, C), dtype=jnp.float32)

    # Deterministic parameters (nn.Linear shapes: qkv (3C, C), proj (C, C)).
    w_qkv = jax.random.normal(kw1, (3 * C, C), dtype=jnp.float32) * 0.05
    w_proj = jax.random.normal(kw2, (C, C), dtype=jnp.float32) * 0.05
    b_proj = jax.random.normal(kb, (C,), dtype=jnp.float32) * 0.01

    params = prepare_params(w_qkv, w_proj, b_proj)

    y = attention_pallas(x, *params)
    jax.block_until_ready(y)

    y_ref = attention_ref(x, w_qkv, w_proj, b_proj)
    assert y.shape == (B, N, C)
    # bf16 MXU operands -> looser tolerance than pure f32.
    assert jnp.allclose(y, y_ref, atol=2e-2, rtol=2e-2), "mismatch vs reference"

    print("KERNEL_OK")
</pallas_src>

<mosaic_0001>
module attributes {stable_mosaic.version = 11 : i64} {
  func.func @_attention_kernel(%arg0: memref<16x32xf32, #tpu.memory_space<vmem>>, %arg1: memref<32x96xbf16, #tpu.memory_space<vmem>>, %arg2: memref<32x32xbf16, #tpu.memory_space<vmem>>, %arg3: memref<1x32xf32, #tpu.memory_space<vmem>>, %arg4: memref<16x32xf32, #tpu.memory_space<vmem>>) attributes {dimension_semantics = [], scalar_prefetch = 0 : i64, scratch_operands = 0 : i64, tpu.core_type = #tpu.core_type<tc>} {
    %c0 = arith.constant 0 : index
    %c0_0 = arith.constant 0 : index
    %0 = vector.load %arg0[%c0, %c0_0] : memref<16x32xf32, #tpu.memory_space<vmem>>, vector<16x32xf32>
    %1 = arith.truncf %0 : vector<16x32xf32> to vector<16x32xbf16>
    %c0_1 = arith.constant 0 : index
    %c0_2 = arith.constant 0 : index
    %2 = vector.load %arg1[%c0_1, %c0_2] : memref<32x96xbf16, #tpu.memory_space<vmem>>, vector<32x96xbf16>
    %cst = arith.constant dense<0.000000e+00> : vector<16x96xf32>
    %3 = tpu.matmul %1, %2, %cst {dimension_numbers = #tpu.dot_dimension_numbers<[1], [0], [0], [1], [0, 0, 1, 1], [], []>} : vector<16x32xbf16>, vector<32x96xbf16>, vector<16x96xf32> -> vector<16x96xf32>
    %4 = vector.extract_strided_slice %3 {offsets = [0, 0], sizes = [8, 8], strides = [1, 1]} : vector<16x96xf32> to vector<8x8xf32>
    %5 = arith.truncf %4 : vector<8x8xf32> to vector<8x8xbf16>
    %6 = vector.extract_strided_slice %3 {offsets = [0, 32], sizes = [8, 8], strides = [1, 1]} : vector<16x96xf32> to vector<8x8xf32>
    %7 = arith.truncf %6 : vector<8x8xf32> to vector<8x8xbf16>
    %8 = vector.extract_strided_slice %3 {offsets = [0, 64], sizes = [8, 8], strides = [1, 1]} : vector<16x96xf32> to vector<8x8xf32>
    %9 = arith.truncf %8 : vector<8x8xf32> to vector<8x8xbf16>
    "tpu.trace_start"() <{level = 10 : i32, message = "qd,kd->qk"}> : () -> ()
    %cst_3 = arith.constant dense<0.000000e+00> : vector<8x8xf32>
    %10 = tpu.matmul %5, %7, %cst_3 {dimension_numbers = #tpu.dot_dimension_numbers<[1], [1], [0], [0], [0, 0, 1, 0], [], []>} : vector<8x8xbf16>, vector<8x8xbf16>, vector<8x8xf32> -> vector<8x8xf32>
    "tpu.trace_stop"() : () -> ()
    %cst_4 = arith.constant dense<0xFF800000> : vector<8xf32>
    %11 = vector.multi_reduction <maximumf>, %10, %cst_4 [1] : vector<8x8xf32> to vector<8xf32>
    %12 = vector.shape_cast %11 : vector<8xf32> to vector<8x1xf32>
    %13 = vector.broadcast %12 : vector<8x1xf32> to vector<8x8xf32>
    %14 = arith.subf %10, %13 : vector<8x8xf32>
    %15 = math.exp %14 : vector<8x8xf32>
    %cst_5 = arith.constant dense<0.000000e+00> : vector<8xf32>
    %16 = vector.multi_reduction <add>, %15, %cst_5 [1] : vector<8x8xf32> to vector<8xf32>
    %17 = vector.shape_cast %16 : vector<8xf32> to vector<8x1xf32>
    %18 = tpu.reciprocal %17 : vector<8x1xf32> -> vector<8x1xf32>
    %19 = vector.broadcast %18 : vector<8x1xf32> to vector<8x8xf32>
    %20 = arith.mulf %15, %19 : vector<8x8xf32>
    %21 = arith.truncf %20 : vector<8x8xf32> to vector<8x8xbf16>
    %cst_6 = arith.constant dense<0.000000e+00> : vector<8x8xf32>
    %22 = tpu.matmul %21, %9, %cst_6 {dimension_numbers = #tpu.dot_dimension_numbers<[1], [0], [0], [1], [0, 0, 1, 1], [], []>} : vector<8x8xbf16>, vector<8x8xbf16>, vector<8x8xf32> -> vector<8x8xf32>
    %23 = vector.extract_strided_slice %3 {offsets = [0, 8], sizes = [8, 8], strides = [1, 1]} : vector<16x96xf32> to vector<8x8xf32>
    %24 = arith.truncf %23 : vector<8x8xf32> to vector<8x8xbf16>
    %25 = vector.extract_strided_slice %3 {offsets = [0, 40], sizes = [8, 8], strides = [1, 1]} : vector<16x96xf32> to vector<8x8xf32>
    %26 = arith.truncf %25 : vector<8x8xf32> to vector<8x8xbf16>
    %27 = vector.extract_strided_slice %3 {offsets = [0, 72], sizes = [8, 8], strides = [1, 1]} : vector<16x96xf32> to vector<8x8xf32>
    %28 = arith.truncf %27 : vector<8x8xf32> to vector<8x8xbf16>
    "tpu.trace_start"() <{level = 10 : i32, message = "qd,kd->qk"}> : () -> ()
    %cst_7 = arith.constant dense<0.000000e+00> : vector<8x8xf32>
    %29 = tpu.matmul %24, %26, %cst_7 {dimension_numbers = #tpu.dot_dimension_numbers<[1], [1], [0], [0], [0, 0, 1, 0], [], []>} : vector<8x8xbf16>, vector<8x8xbf16>, vector<8x8xf32> -> vector<8x8xf32>
    "tpu.trace_stop"() : () -> ()
    %cst_8 = arith.constant dense<0xFF800000> : vector<8xf32>
    %30 = vector.multi_reduction <maximumf>, %29, %cst_8 [1] : vector<8x8xf32> to vector<8xf32>
    %31 = vector.shape_cast %30 : vector<8xf32> to vector<8x1xf32>
    %32 = vector.broadcast %31 : vector<8x1xf32> to vector<8x8xf32>
    %33 = arith.subf %29, %32 : vector<8x8xf32>
    %34 = math.exp %33 : vector<8x8xf32>
    %cst_9 = arith.constant dense<0.000000e+00> : vector<8xf32>
    %35 = vector.multi_reduction <add>, %34, %cst_9 [1] : vector<8x8xf32> to vector<8xf32>
    %36 = vector.shape_cast %35 : vector<8xf32> to vector<8x1xf32>
    %37 = tpu.reciprocal %36 : vector<8x1xf32> -> vector<8x1xf32>
    %38 = vector.broadcast %37 : vector<8x1xf32> to vector<8x8xf32>
    %39 = arith.mulf %34, %38 : vector<8x8xf32>
    %40 = arith.truncf %39 : vector<8x8xf32> to vector<8x8xbf16>
    %cst_10 = arith.constant dense<0.000000e+00> : vector<8x8xf32>
    %41 = tpu.matmul %40, %28, %cst_10 {dimension_numbers = #tpu.dot_dimension_numbers<[1], [0], [0], [1], [0, 0, 1, 1], [], []>} : vector<8x8xbf16>, vector<8x8xbf16>, vector<8x8xf32> -> vector<8x8xf32>
    %42 = vector.extract_strided_slice %3 {offsets = [0, 16], sizes = [8, 8], strides = [1, 1]} : vector<16x96xf32> to vector<8x8xf32>
    %43 = arith.truncf %42 : vector<8x8xf32> to vector<8x8xbf16>
    %44 = vector.extract_strided_slice %3 {offsets = [0, 48], sizes = [8, 8], strides = [1, 1]} : vector<16x96xf32> to vector<8x8xf32>
    %45 = arith.truncf %44 : vector<8x8xf32> to vector<8x8xbf16>
    %46 = vector.extract_strided_slice %3 {offsets = [0, 80], sizes = [8, 8], strides = [1, 1]} : vector<16x96xf32> to vector<8x8xf32>
    %47 = arith.truncf %46 : vector<8x8xf32> to vector<8x8xbf16>
    "tpu.trace_start"() <{level = 10 : i32, message = "qd,kd->qk"}> : () -> ()
    %cst_11 = arith.constant dense<0.000000e+00> : vector<8x8xf32>
    %48 = tpu.matmul %43, %45, %cst_11 {dimension_numbers = #tpu.dot_dimension_numbers<[1], [1], [0], [0], [0, 0, 1, 0], [], []>} : vector<8x8xbf16>, vector<8x8xbf16>, vector<8x8xf32> -> vector<8x8xf32>
    "tpu.trace_stop"() : () -> ()
    %cst_12 = arith.constant dense<0xFF800000> : vector<8xf32>
    %49 = vector.multi_reduction <maximumf>, %48, %cst_12 [1] : vector<8x8xf32> to vector<8xf32>
    %50 = vector.shape_cast %49 : vector<8xf32> to vector<8x1xf32>
    %51 = vector.broadcast %50 : vector<8x1xf32> to vector<8x8xf32>
    %52 = arith.subf %48, %51 : vector<8x8xf32>
    %53 = math.exp %52 : vector<8x8xf32>
    %cst_13 = arith.constant dense<0.000000e+00> : vector<8xf32>
    %54 = vector.multi_reduction <add>, %53, %cst_13 [1] : vector<8x8xf32> to vector<8xf32>
    %55 = vector.shape_cast %54 : vector<8xf32> to vector<8x1xf32>
    %56 = tpu.reciprocal %55 : vector<8x1xf32> -> vector<8x1xf32>
    %57 = vector.broadcast %56 : vector<8x1xf32> to vector<8x8xf32>
    %58 = arith.mulf %53, %57 : vector<8x8xf32>
    %59 = arith.truncf %58 : vector<8x8xf32> to vector<8x8xbf16>
    %cst_14 = arith.constant dense<0.000000e+00> : vector<8x8xf32>
    %60 = tpu.matmul %59, %47, %cst_14 {dimension_numbers = #tpu.dot_dimension_numbers<[1], [0], [0], [1], [0, 0, 1, 1], [], []>} : vector<8x8xbf16>, vector<8x8xbf16>, vector<8x8xf32> -> vector<8x8xf32>
    %61 = vector.extract_strided_slice %3 {offsets = [0, 24], sizes = [8, 8], strides = [1, 1]} : vector<16x96xf32> to vector<8x8xf32>
    %62 = arith.truncf %61 : vector<8x8xf32> to vector<8x8xbf16>
    %63 = vector.extract_strided_slice %3 {offsets = [0, 56], sizes = [8, 8], strides = [1, 1]} : vector<16x96xf32> to vector<8x8xf32>
    %64 = arith.truncf %63 : vector<8x8xf32> to vector<8x8xbf16>
    %65 = vector.extract_strided_slice %3 {offsets = [0, 88], sizes = [8, 8], strides = [1, 1]} : vector<16x96xf32> to vector<8x8xf32>
    %66 = arith.truncf %65 : vector<8x8xf32> to vector<8x8xbf16>
    "tpu.trace_start"() <{level = 10 : i32, message = "qd,kd->qk"}> : () -> ()
    %cst_15 = arith.constant dense<0.000000e+00> : vector<8x8xf32>
    %67 = tpu.matmul %62, %64, %cst_15 {dimension_numbers = #tpu.dot_dimension_numbers<[1], [1], [0], [0], [0, 0, 1, 0], [], []>} : vector<8x8xbf16>, vector<8x8xbf16>, vector<8x8xf32> -> vector<8x8xf32>
    "tpu.trace_stop"() : () -> ()
    %cst_16 = arith.constant dense<0xFF800000> : vector<8xf32>
    %68 = vector.multi_reduction <maximumf>, %67, %cst_16 [1] : vector<8x8xf32> to vector<8xf32>
    %69 = vector.shape_cast %68 : vector<8xf32> to vector<8x1xf32>
    %70 = vector.broadcast %69 : vector<8x1xf32> to vector<8x8xf32>
    %71 = arith.subf %67, %70 : vector<8x8xf32>
    %72 = math.exp %71 : vector<8x8xf32>
    %cst_17 = arith.constant dense<0.000000e+00> : vector<8xf32>
    %73 = vector.multi_reduction <add>, %72, %cst_17 [1] : vector<8x8xf32> to vector<8xf32>
    %74 = vector.shape_cast %73 : vector<8xf32> to vector<8x1xf32>
    %75 = tpu.reciprocal %74 : vector<8x1xf32> -> vector<8x1xf32>
    %76 = vector.broadcast %75 : vector<8x1xf32> to vector<8x8xf32>
    %77 = arith.mulf %72, %76 : vector<8x8xf32>
    %78 = arith.truncf %77 : vector<8x8xf32> to vector<8x8xbf16>
    %cst_18 = arith.constant dense<0.000000e+00> : vector<8x8xf32>
    %79 = tpu.matmul %78, %66, %cst_18 {dimension_numbers = #tpu.dot_dimension_numbers<[1], [0], [0], [1], [0, 0, 1, 1], [], []>} : vector<8x8xbf16>, vector<8x8xbf16>, vector<8x8xf32> -> vector<8x8xf32>
    %80 = tpu.concatenate %22, %41, %60, %79 in 1 : vector<8x8xf32>, vector<8x8xf32>, vector<8x8xf32>, vector<8x8xf32> -> vector<8x32xf32>
    %81 = vector.extract_strided_slice %3 {offsets = [8, 0], sizes = [8, 8], strides = [1, 1]} : vector<16x96xf32> to vector<8x8xf32>
    %82 = arith.truncf %81 : vector<8x8xf32> to vector<8x8xbf16>
    %83 = vector.extract_strided_slice %3 {offsets = [8, 32], sizes = [8, 8], strides = [1, 1]} : vector<16x96xf32> to vector<8x8xf32>
    %84 = arith.truncf %83 : vector<8x8xf32> to vector<8x8xbf16>
    %85 = vector.extract_strided_slice %3 {offsets = [8, 64], sizes = [8, 8], strides = [1, 1]} : vector<16x96xf32> to vector<8x8xf32>
    %86 = arith.truncf %85 : vector<8x8xf32> to vector<8x8xbf16>
    "tpu.trace_start"() <{level = 10 : i32, message = "qd,kd->qk"}> : () -> ()
    %cst_19 = arith.constant dense<0.000000e+00> : vector<8x8xf32>
    %87 = tpu.matmul %82, %84, %cst_19 {dimension_numbers = #tpu.dot_dimension_numbers<[1], [1], [0], [0], [0, 0, 1, 0], [], []>} : vector<8x8xbf16>, vector<8x8xbf16>, vector<8x8xf32> -> vector<8x8xf32>
    "tpu.trace_stop"() : () -> ()
    %cst_20 = arith.constant dense<0xFF800000> : vector<8xf32>
    %88 = vector.multi_reduction <maximumf>, %87, %cst_20 [1] : vector<8x8xf32> to vector<8xf32>
    %89 = vector.shape_cast %88 : vector<8xf32> to vector<8x1xf32>
    %90 = vector.broadcast %89 : vector<8x1xf32> to vector<8x8xf32>
    %91 = arith.subf %87, %90 : vector<8x8xf32>
    %92 = math.exp %91 : vector<8x8xf32>
    %cst_21 = arith.constant dense<0.000000e+00> : vector<8xf32>
    %93 = vector.multi_reduction <add>, %92, %cst_21 [1] : vector<8x8xf32> to vector<8xf32>
    %94 = vector.shape_cast %93 : vector<8xf32> to vector<8x1xf32>
    %95 = tpu.reciprocal %94 : vector<8x1xf32> -> vector<8x1xf32>
    %96 = vector.broadcast %95 : vector<8x1xf32> to vector<8x8xf32>
    %97 = arith.mulf %92, %96 : vector<8x8xf32>
    %98 = arith.truncf %97 : vector<8x8xf32> to vector<8x8xbf16>
    %cst_22 = arith.constant dense<0.000000e+00> : vector<8x8xf32>
    %99 = tpu.matmul %98, %86, %cst_22 {dimension_numbers = #tpu.dot_dimension_numbers<[1], [0], [0], [1], [0, 0, 1, 1], [], []>} : vector<8x8xbf16>, vector<8x8xbf16>, vector<8x8xf32> -> vector<8x8xf32>
    %100 = vector.extract_strided_slice %3 {offsets = [8, 8], sizes = [8, 8], strides = [1, 1]} : vector<16x96xf32> to vector<8x8xf32>
    %101 = arith.truncf %100 : vector<8x8xf32> to vector<8x8xbf16>
    %102 = vector.extract_strided_slice %3 {offsets = [8, 40], sizes = [8, 8], strides = [1, 1]} : vector<16x96xf32> to vector<8x8xf32>
    %103 = arith.truncf %102 : vector<8x8xf32> to vector<8x8xbf16>
    %104 = vector.extract_strided_slice %3 {offsets = [8, 72], sizes = [8, 8], strides = [1, 1]} : vector<16x96xf32> to vector<8x8xf32>
    %105 = arith.truncf %104 : vector<8x8xf32> to vector<8x8xbf16>
    "tpu.trace_start"() <{level = 10 : i32, message = "qd,kd->qk"}> : () -> ()
    %cst_23 = arith.constant dense<0.000000e+00> : vector<8x8xf32>
    %106 = tpu.matmul %101, %103, %cst_23 {dimension_numbers = #tpu.dot_dimension_numbers<[1], [1], [0], [0], [0, 0, 1, 0], [], []>} : vector<8x8xbf16>, vector<8x8xbf16>, vector<8x8xf32> -> vector<8x8xf32>
    "tpu.trace_stop"() : () -> ()
    %cst_24 = arith.constant dense<0xFF800000> : vector<8xf32>
    %107 = vector.multi_reduction <maximumf>, %106, %cst_24 [1] : vector<8x8xf32> to vector<8xf32>
    %108 = vector.shape_cast %107 : vector<8xf32> to vector<8x1xf32>
    %109 = vector.broadcast %108 : vector<8x1xf32> to vector<8x8xf32>
    %110 = arith.subf %106, %109 : vector<8x8xf32>
    %111 = math.exp %110 : vector<8x8xf32>
    %cst_25 = arith.constant dense<0.000000e+00> : vector<8xf32>
    %112 = vector.multi_reduction <add>, %111, %cst_25 [1] : vector<8x8xf32> to vector<8xf32>
    %113 = vector.shape_cast %112 : vector<8xf32> to vector<8x1xf32>
    %114 = tpu.reciprocal %113 : vector<8x1xf32> -> vector<8x1xf32>
    %115 = vector.broadcast %114 : vector<8x1xf32> to vector<8x8xf32>
    %116 = arith.mulf %111, %115 : vector<8x8xf32>
    %117 = arith.truncf %116 : vector<8x8xf32> to vector<8x8xbf16>
    %cst_26 = arith.constant dense<0.000000e+00> : vector<8x8xf32>
    %118 = tpu.matmul %117, %105, %cst_26 {dimension_numbers = #tpu.dot_dimension_numbers<[1], [0], [0], [1], [0, 0, 1, 1], [], []>} : vector<8x8xbf16>, vector<8x8xbf16>, vector<8x8xf32> -> vector<8x8xf32>
    %119 = vector.extract_strided_slice %3 {offsets = [8, 16], sizes = [8, 8], strides = [1, 1]} : vector<16x96xf32> to vector<8x8xf32>
    %120 = arith.truncf %119 : vector<8x8xf32> to vector<8x8xbf16>
    %121 = vector.extract_strided_slice %3 {offsets = [8, 48], sizes = [8, 8], strides = [1, 1]} : vector<16x96xf32> to vector<8x8xf32>
    %122 = arith.truncf %121 : vector<8x8xf32> to vector<8x8xbf16>
    %123 = vector.extract_strided_slice %3 {offsets = [8, 80], sizes = [8, 8], strides = [1, 1]} : vector<16x96xf32> to vector<8x8xf32>
    %124 = arith.truncf %123 : vector<8x8xf32> to vector<8x8xbf16>
    "tpu.trace_start"() <{level = 10 : i32, message = "qd,kd->qk"}> : () -> ()
    %cst_27 = arith.constant dense<0.000000e+00> : vector<8x8xf32>
    %125 = tpu.matmul %120, %122, %cst_27 {dimension_numbers = #tpu.dot_dimension_numbers<[1], [1], [0], [0], [0, 0, 1, 0], [], []>} : vector<8x8xbf16>, vector<8x8xbf16>, vector<8x8xf32> -> vector<8x8xf32>
    "tpu.trace_stop"() : () -> ()
    %cst_28 = arith.constant dense<0xFF800000> : vector<8xf32>
    %126 = vector.multi_reduction <maximumf>, %125, %cst_28 [1] : vector<8x8xf32> to vector<8xf32>
    %127 = vector.shape_cast %126 : vector<8xf32> to vector<8x1xf32>
    %128 = vector.broadcast %127 : vector<8x1xf32> to vector<8x8xf32>
    %129 = arith.subf %125, %128 : vector<8x8xf32>
    %130 = math.exp %129 : vector<8x8xf32>
    %cst_29 = arith.constant dense<0.000000e+00> : vector<8xf32>
    %131 = vector.multi_reduction <add>, %130, %cst_29 [1] : vector<8x8xf32> to vector<8xf32>
    %132 = vector.shape_cast %131 : vector<8xf32> to vector<8x1xf32>
    %133 = tpu.reciprocal %132 : vector<8x1xf32> -> vector<8x1xf32>
    %134 = vector.broadcast %133 : vector<8x1xf32> to vector<8x8xf32>
    %135 = arith.mulf %130, %134 : vector<8x8xf32>
    %136 = arith.truncf %135 : vector<8x8xf32> to vector<8x8xbf16>
    %cst_30 = arith.constant dense<0.000000e+00> : vector<8x8xf32>
    %137 = tpu.matmul %136, %124, %cst_30 {dimension_numbers = #tpu.dot_dimension_numbers<[1], [0], [0], [1], [0, 0, 1, 1], [], []>} : vector<8x8xbf16>, vector<8x8xbf16>, vector<8x8xf32> -> vector<8x8xf32>
    %138 = vector.extract_strided_slice %3 {offsets = [8, 24], sizes = [8, 8], strides = [1, 1]} : vector<16x96xf32> to vector<8x8xf32>
    %139 = arith.truncf %138 : vector<8x8xf32> to vector<8x8xbf16>
    %140 = vector.extract_strided_slice %3 {offsets = [8, 56], sizes = [8, 8], strides = [1, 1]} : vector<16x96xf32> to vector<8x8xf32>
    %141 = arith.truncf %140 : vector<8x8xf32> to vector<8x8xbf16>
    %142 = vector.extract_strided_slice %3 {offsets = [8, 88], sizes = [8, 8], strides = [1, 1]} : vector<16x96xf32> to vector<8x8xf32>
    %143 = arith.truncf %142 : vector<8x8xf32> to vector<8x8xbf16>
    "tpu.trace_start"() <{level = 10 : i32, message = "qd,kd->qk"}> : () -> ()
    %cst_31 = arith.constant dense<0.000000e+00> : vector<8x8xf32>
    %144 = tpu.matmul %139, %141, %cst_31 {dimension_numbers = #tpu.dot_dimension_numbers<[1], [1], [0], [0], [0, 0, 1, 0], [], []>} : vector<8x8xbf16>, vector<8x8xbf16>, vector<8x8xf32> -> vector<8x8xf32>
    "tpu.trace_stop"() : () -> ()
    %cst_32 = arith.constant dense<0xFF800000> : vector<8xf32>
    %145 = vector.multi_reduction <maximumf>, %144, %cst_32 [1] : vector<8x8xf32> to vector<8xf32>
    %146 = vector.shape_cast %145 : vector<8xf32> to vector<8x1xf32>
    %147 = vector.broadcast %146 : vector<8x1xf32> to vector<8x8xf32>
    %148 = arith.subf %144, %147 : vector<8x8xf32>
    %149 = math.exp %148 : vector<8x8xf32>
    %cst_33 = arith.constant dense<0.000000e+00> : vector<8xf32>
    %150 = vector.multi_reduction <add>, %149, %cst_33 [1] : vector<8x8xf32> to vector<8xf32>
    %151 = vector.shape_cast %150 : vector<8xf32> to vector<8x1xf32>
    %152 = tpu.reciprocal %151 : vector<8x1xf32> -> vector<8x1xf32>
    %153 = vector.broadcast %152 : vector<8x1xf32> to vector<8x8xf32>
    %154 = arith.mulf %149, %153 : vector<8x8xf32>
    %155 = arith.truncf %154 : vector<8x8xf32> to vector<8x8xbf16>
    %cst_34 = arith.constant dense<0.000000e+00> : vector<8x8xf32>
    %156 = tpu.matmul %155, %143, %cst_34 {dimension_numbers = #tpu.dot_dimension_numbers<[1], [0], [0], [1], [0, 0, 1, 1], [], []>} : vector<8x8xbf16>, vector<8x8xbf16>, vector<8x8xf32> -> vector<8x8xf32>
    %157 = tpu.concatenate %99, %118, %137, %156 in 1 : vector<8x8xf32>, vector<8x8xf32>, vector<8x8xf32>, vector<8x8xf32> -> vector<8x32xf32>
    %158 = tpu.concatenate %80, %157 in 0 : vector<8x32xf32>, vector<8x32xf32> -> vector<16x32xf32>
    %159 = arith.truncf %158 : vector<16x32xf32> to vector<16x32xbf16>
    %c0_35 = arith.constant 0 : index
    %c0_36 = arith.constant 0 : index
    %160 = vector.load %arg2[%c0_35, %c0_36] : memref<32x32xbf16, #tpu.memory_space<vmem>>, vector<32x32xbf16>
    %cst_37 = arith.constant dense<0.000000e+00> : vector<16x32xf32>
    %161 = tpu.matmul %159, %160, %cst_37 {dimension_numbers = #tpu.dot_dimension_numbers<[1], [0], [0], [1], [0, 0, 1, 1], [], []>} : vector<16x32xbf16>, vector<32x32xbf16>, vector<16x32xf32> -> vector<16x32xf32>
    %c0_38 = arith.constant 0 : index
    %c0_39 = arith.constant 0 : index
    %162 = vector.load %arg3[%c0_38, %c0_39] : memref<1x32xf32, #tpu.memory_space<vmem>>, vector<1x32xf32>
    %163 = vector.broadcast %162 : vector<1x32xf32> to vector<16x32xf32>
    %164 = arith.addf %161, %163 : vector<16x32xf32>
    %c0_40 = arith.constant 0 : index
    %c0_41 = arith.constant 0 : index
    %165 = vector.load %arg4[%c0_40, %c0_41] : memref<16x32xf32, #tpu.memory_space<vmem>>, vector<16x32xf32>
    tpu.vector_store %arg4[%c0_40, %c0_41], %164 {strides = array<i32>} : memref<16x32xf32, #tpu.memory_space<vmem>>, vector<16x32xf32>,
    return
  }
}

</mosaic_0001>

<llo_original>
// kernel: attention_pallas.1
$region0: #{attention_pallas.1}
  #allocation0 [shape = 'u32[]', space=smem, size = 0x4, offset = 0x4, fixed_abs, tag = 'smem constant byte address 0x4 - core index']
  #allocation1 [shape = 'u32[144,128]{1,0:T(1,128)}', space=vmem, size = 0x12000, scoped, tag = 'internal scratch']
  %s0 = inlined_call_operand.hbm [shape: f32[16,32], index: 0, kind: input, shape index: {}]
  %s1 = inlined_call_operand.hbm [shape: bf16[32,96], index: 1, kind: input, shape index: {}]
  %s2 = inlined_call_operand.hbm [shape: bf16[32,32], index: 2, kind: input, shape index: {}]
  %s3 = inlined_call_operand.vmem [shape: f32[1,32], index: 3, kind: input, shape index: {}]
  %s4 = inlined_call_operand.hbm [shape: f32[16,32], index: 4, kind: output, shape index: {}]
  %s5 = sld [smem:[#allocation0]]
  $region38: #{attention_pallas.1} parent=0
    _
  %s7 = ssub.s32 1, %s5
  %s8 = scalar_select 0, %s7, %s5
  $region1: #{attention_pallas.1} parent=0
    #allocation2 [shape = 'u8[8192]{0}', space=vmem, size = 0x2000, scoped, tag = 'input window, operand 0, single buffered']
    #allocation3 [shape = 's32[1]{0}', space=sflag, size = 0x4, scoped, tag = 'scoped memory for attention_pallas.1']
    #allocation4 [shape = 's32[1]{0}', space=sflag, size = 0x4, scoped, tag = 'scoped memory for attention_pallas.1']
    #allocation5 [shape = 'u8[8192]{0}', space=vmem, size = 0x2000, scoped, tag = 'input window, operand 1, single buffered']
    #allocation6 [shape = 's32[1]{0}', space=sflag, size = 0x4, scoped, tag = 'scoped memory for attention_pallas.1']
    #allocation7 [shape = 'u8[8192]{0}', space=vmem, size = 0x2000, scoped, tag = 'input window, operand 2, single buffered']
    #allocation8 [shape = 'u8[8192]{0}', space=vmem, size = 0x2000, scoped, tag = 'output window, operand 0, single buffered']
    %9 = vsyncpa [#allocation3], 0
    %10 = vsyncpa [#allocation6], 0
    %11 = vsyncpa [#allocation4], 0
    // Predicated region
    $region2: #{attention_pallas.1} parent=1 // pred_check
      _
    $region3: #{attention_pallas.1} parent=1 // pred_check_branch
      %13 = sbr.rel (0) target = $region5
    $region4: #{attention_pallas.1} parent=1 // pred_region
      %s15 = ssub.s32 256, 256
      %16 = vsyncadd [#allocation3], %s15
      %s17 = sshll.u32 [#allocation2], 4
      %s18 = int_to_ptr.vmem [resolvable:$true] %s17
      %23 = dma.hbm_to_vmem [thread:$0]  %s0, 256, %s18, [#allocation3], 128, 128, 8
    $region5: #{attention_pallas.1} parent=1 // pred_fallthru
      _
    // Predicated region
    $region6: #{attention_pallas.1} parent=1 // pred_check
      _
    $region7: #{attention_pallas.1} parent=1 // pred_check_branch
      %25 = sbr.rel (0) target = $region9
    $region8: #{attention_pallas.1} parent=1 // pred_region
      %s27 = ssub.s32 256, 256
      %28 = vsyncadd [#allocation6], %s27
      %s29 = sshll.u32 [#allocation5], 4
      %s30 = int_to_ptr.vmem [resolvable:$true] %s29
      %35 = dma.hbm_to_vmem [thread:$0]  %s1, 256, %s30, [#allocation6], 64, 64, 4
    $region9: #{attention_pallas.1} parent=1 // pred_fallthru
      _
    // Predicated region
    $region10: #{attention_pallas.1} parent=1 // pred_check
      _
    $region11: #{attention_pallas.1} parent=1 // pred_check_branch
      %37 = sbr.rel (0) target = $region13
    $region12: #{attention_pallas.1} parent=1 // pred_region
      %s39 = ssub.s32 256, 256
      %40 = vsyncadd [#allocation6], %s39
      %s41 = sshll.u32 [#allocation7], 4
      %s42 = int_to_ptr.vmem [resolvable:$true] %s41
      %47 = dma.hbm_to_vmem [thread:$0]  %s2, 256, %s42, [#allocation6], 64, 64, 4
    $region13: #{attention_pallas.1} parent=1 // pred_fallthru
      _
    // Predicated region
    $region14: #{attention_pallas.1} parent=1 // pred_check
      _
    $region15: #{attention_pallas.1} parent=1 // pred_check_branch
      %49 = sbr.rel (0) target = $region17
    $region16: #{attention_pallas.1} parent=1 // pred_region
      _
    $region17: #{attention_pallas.1} parent=1 // pred_fallthru
      _
    // Predicated region
    $region18: #{attention_pallas.1} parent=1 // pred_check
      _
    $region19: #{attention_pallas.1} parent=1 // pred_check_branch
      %51 = sbr.rel (0) target = $region21
    $region20: #{attention_pallas.1} parent=1 // pred_region
      %52 = dma.done [#allocation3], 256
    $region21: #{attention_pallas.1} parent=1 // pred_fallthru
      _
    // Predicated region
    $region22: #{attention_pallas.1} parent=1 // pred_check
      _
    $region23: #{attention_pallas.1} parent=1 // pred_check_branch
      %54 = sbr.rel (0) target = $region25
    $region24: #{attention_pallas.1} parent=1 // pred_region
      %55 = dma.done [#allocation6], 256
    $region25: #{attention_pallas.1} parent=1 // pred_fallthru
      _
    // Predicated region
    $region26: #{attention_pallas.1} parent=1 // pred_check
      _
    $region27: #{attention_pallas.1} parent=1 // pred_check_branch
      %57 = sbr.rel (0) target = $region29
    $region28: #{attention_pallas.1} parent=1 // pred_region
      %58 = dma.done [#allocation6], 256
    $region29: #{attention_pallas.1} parent=1 // pred_fallthru
      _
    %v60 = vld [vmem:[#allocation2] sm:$0xff]
    %v61 = vld [vmem:[#allocation2 + $0x8] sm:$0xff]
    %v62 = vpack.c.bf16 %v61, %v60
    %v63 = vld [vmem:[#allocation5] sm:$0xf]
    %v64 = vld [vmem:[#allocation5 + $0x4] sm:$0xf]
    %v65 = vld [vmem:[#allocation5 + $0x8] sm:$0xf]
    %v66 = vld [vmem:[#allocation5 + $0xc] sm:$0xf]
    %v71 = vunpack.c.l.b16 %v63
    %v72 = vunpack.c.l.b16 %v64
    %v73 = vunpack.c.l.b16 %v65
    %v74 = vunpack.c.l.b16 %v66
    %v75 = vpack.c.b16 %v72, %v71
    %v76 = vpack.c.b16 %v74, %v73
    %vm79 = vcmask 261120
    %v81 = vsel %vm79, %v62, 0
    %83 = vmatprep.subr.bf16.mxu0 0
    %84 = vmatpush1.bf16.msra.mxu0 %v75
    %85 = vmatprep.subr.bf16.mxu0 0
    %86 = vmatpush1.bf16.msra.mxu0 %v76
    %87 = vmatprep.subr.bf16.mxu0 0
    %88 = vmatpush1.bf16.msra.mxu0 0
    %89 = vmatprep.subr.bf16.mxu0 0
    %90 = vmatpush1.bf16.msra.mxu0 0
    %91 = vmatprep.subr.bf16.mxu0 0
    %92 = vmatpush1.bf16.msra.mxu0 0
    %93 = vmatprep.subr.bf16.mxu0 0
    %94 = vmatpush1.bf16.msra.mxu0 0
    %95 = vmatprep.subr.bf16.mxu0 0
    %96 = vmatpush1.bf16.msra.mxu0 0
    %97 = vmatprep.subr.bf16.mxu0 0
    %98 = vmatpush1.bf16.msra.mxu0 0
    %99 = vmatprep.subr.bf16.mxu0 0
    %100 = vmatpush1.bf16.msra.mxu0 0
    %101 = vmatprep.subr.bf16.mxu0 0
    %102 = vmatpush1.bf16.msra.mxu0 0
    %103 = vmatprep.subr.bf16.mxu0 0
    %104 = vmatpush1.bf16.msra.mxu0 0
    %105 = vmatprep.subr.bf16.mxu0 0
    %106 = vmatpush1.bf16.msra.mxu0 0
    %107 = vmatprep.subr.bf16.mxu0 0
    %108 = vmatpush1.bf16.msra.mxu0 0
    %109 = vmatprep.subr.bf16.mxu0 0
    %110 = vmatpush1.bf16.msra.mxu0 0
    %111 = vmatprep.subr.bf16.mxu0 0
    %112 = vmatpush1.bf16.msra.mxu0 0
    %113 = vmatprep.subr.bf16.mxu0 0
    %114 = vmatpush1.bf16.msra.mxu0 0
    %115 = vmatprep.mubr.bf16.mxu0 0
    %116 = vmatmul.mubr.bf16.gmra.mrb[0].mxu0 %v81
    %v117 = vpop.f32.mrb[0].mxu0
    %v118 = vadd.f32 0.0, %v117
    %v119 = vpop.f32.mrb[0].mxu0
    %v120 = vpop.f32.mrb[0].mxu0
    %v121 = vadd.f32 0.0, %v120
    %v122 = vpop.f32.mrb[0].mxu0
    %123 = vdwg.mxu0
    %v124 = vpack.c.bf16 %v118, %v118
    %126 = vrot.lane.b32.xlu0 %v124, 96
    %v127 = vpop.permute.xlu0 %126
    %vm128 = vcmask 64512
    %v130 = vsel %vm128, %v124, 0
    %v133 = vsel %vm128, %v127, 0
    %135 = vmatprep.subr.bf16.mxu0 0
    %136 = vmatpush1.bf16.xpose.msra.mxu0 %v133
    %137 = vmatprep.subr.bf16.mxu0 0
    %138 = vmatpush1.bf16.xpose.msra.mxu0 0
    %139 = vmatprep.subr.bf16.mxu0 0
    %140 = vmatpush1.bf16.xpose.msra.mxu0 0
    %141 = vmatprep.subr.bf16.mxu0 0
    %142 = vmatpush1.bf16.xpose.msra.mxu0 0
    %143 = vmatprep.subr.bf16.mxu0 0
    %144 = vmatpush1.bf16.xpose.msra.mxu0 0
    %145 = vmatprep.subr.bf16.mxu0 0
    %146 = vmatpush1.bf16.xpose.msra.mxu0 0
    %147 = vmatprep.subr.bf16.mxu0 0
    %148 = vmatpush1.bf16.xpose.msra.mxu0 0
    %149 = vmatprep.subr.bf16.mxu0 0
    %150 = vmatpush1.bf16.xpose.msra.mxu0 0
    %151 = vmatprep.subr.bf16.mxu0 0
    %152 = vmatpush1.bf16.xpose.msra.mxu0 0
    %153 = vmatprep.subr.bf16.mxu0 0
    %154 = vmatpush1.bf16.xpose.msra.mxu0 0
    %155 = vmatprep.subr.bf16.mxu0 0
    %156 = vmatpush1.bf16.xpose.msra.mxu0 0
    %157 = vmatprep.subr.bf16.mxu0 0
    %158 = vmatpush1.bf16.xpose.msra.mxu0 0
    %159 = vmatprep.subr.bf16.mxu0 0
    %160 = vmatpush1.bf16.xpose.msra.mxu0 0
    %161 = vmatprep.subr.bf16.mxu0 0
    %162 = vmatpush1.bf16.xpose.msra.mxu0 0
    %163 = vmatprep.subr.bf16.mxu0 0
    %164 = vmatpush1.bf16.xpose.msra.mxu0 0
    %165 = vmatprep.subr.bf16.mxu0 0
    %166 = vmatpush1.bf16.xpose.msra.mxu0 0
    %167 = vmatprep.mubr.bf16.mxu0 0
    %168 = vmatmul.mubr.bf16.gmra.mrb[0].mxu0 %v130
    %v169 = vpop.f32.mrb[0].mxu0
    %v170 = vadd.f32 0.0, %v169
    %v171 = vpop.f32.mrb[0].mxu0
    %v172 = vpop.f32.mrb[0].mxu0
    %v173 = vpop.f32.mrb[0].mxu0
    %174 = vdwg.mxu0
    %v175 = vsel %vm128, %v170, -inf
    %176 = vmax.xlane.f32.xlu0 %v175
    %v177 = vpop.xlane.xlu0 %176
    %v178 = vsub.f32 %v170, %v177
    %v179 = vmul.f32 %v178, 1.442695
    %v180 = vpow.pop %v179
    %v181 = vsel %vm128, %v180, 0.0
    %182 = vadd.xlane.f32.xlu0 %v181
    %v183 = vpop.xlane.xlu0 %182
    %v184 = vrcp.pop %v183
    %v185 = vmul.f32 %v180, %v184
    %v186 = vpack.c.bf16 %v185, %v185
    %187 = vrot.lane.b32.xlu0 %v124, 64
    %v188 = vpop.permute.xlu0 %187
    %v190 = vsel %vm128, %v186, 0
    %vm192 = vcmask 1043456
    %v194 = vsel %vm192, %v188, 0
    %196 = vmatprep.subr.bf16.mxu0 0
    %197 = vmatpush1.bf16.msra.mxu0 %v194
    %198 = vmatprep.subr.bf16.mxu0 0
    %199 = vmatpush1.bf16.msra.mxu0 0
    %200 = vmatprep.subr.bf16.mxu0 0
    %201 = vmatpush1.bf16.msra.mxu0 0
    %202 = vmatprep.subr.bf16.mxu0 0
    %203 = vmatpush1.bf16.msra.mxu0 0
    %204 = vmatprep.subr.bf16.mxu0 0
    %205 = vmatpush1.bf16.msra.mxu0 0
    %206 = vmatprep.subr.bf16.mxu0 0
    %207 = vmatpush1.bf16.msra.mxu0 0
    %208 = vmatprep.subr.bf16.mxu0 0
    %209 = vmatpush1.bf16.msra.mxu0 0
    %210 = vmatprep.subr.bf16.mxu0 0
    %211 = vmatpush1.bf16.msra.mxu0 0
    %212 = vmatprep.subr.bf16.mxu0 0
    %213 = vmatpush1.bf16.msra.mxu0 0
    %214 = vmatprep.subr.bf16.mxu0 0
    %215 = vmatpush1.bf16.msra.mxu0 0
    %216 = vmatprep.subr.bf16.mxu0 0
    %217 = vmatpush1.bf16.msra.mxu0 0
    %218 = vmatprep.subr.bf16.mxu0 0
    %219 = vmatpush1.bf16.msra.mxu0 0
    %220 = vmatprep.subr.bf16.mxu0 0
    %221 = vmatpush1.bf16.msra.mxu0 0
    %222 = vmatprep.subr.bf16.mxu0 0
    %223 = vmatpush1.bf16.msra.mxu0 0
    %224 = vmatprep.subr.bf16.mxu0 0
    %225 = vmatpush1.bf16.msra.mxu0 0
    %226 = vmatprep.subr.bf16.mxu0 0
    %227 = vmatpush1.bf16.msra.mxu0 0
    %228 = vmatprep.mubr.bf16.mxu0 0
    %229 = vmatmul.mubr.bf16.gmra.mrb[0].mxu0 %v190
    %v230 = vpop.f32.mrb[0].mxu0
    %v231 = vadd.f32 0.0, %v230
    %v232 = vpop.f32.mrb[0].mxu0
    %v233 = vpop.f32.mrb[0].mxu0
    %v234 = vpop.f32.mrb[0].mxu0
    %235 = vdwg.mxu0
    %236 = vrot.lane.b32.xlu0 %v124, 120
    %v237 = vpop.permute.xlu0 %236
    %238 = vrot.lane.b32.xlu0 %v124, 88
    %v239 = vpop.permute.xlu0 %238
    %v241 = vsel %vm128, %v237, 0
    %v244 = vsel %vm128, %v239, 0
    %246 = vmatprep.subr.bf16.mxu0 0
    %247 = vmatpush1.bf16.xpose.msra.mxu0 %v244
    %248 = vmatprep.subr.bf16.mxu0 0
    %249 = vmatpush1.bf16.xpose.msra.mxu0 0
    %250 = vmatprep.subr.bf16.mxu0 0
    %251 = vmatpush1.bf16.xpose.msra.mxu0 0
    %252 = vmatprep.subr.bf16.mxu0 0
    %253 = vmatpush1.bf16.xpose.msra.mxu0 0
    %254 = vmatprep.subr.bf16.mxu0 0
    %255 = vmatpush1.bf16.xpose.msra.mxu0 0
    %256 = vmatprep.subr.bf16.mxu0 0
    %257 = vmatpush1.bf16.xpose.msra.mxu0 0
    %258 = vmatprep.subr.bf16.mxu0 0
    %259 = vmatpush1.bf16.xpose.msra.mxu0 0
    %260 = vmatprep.subr.bf16.mxu0 0
    %261 = vmatpush1.bf16.xpose.msra.mxu0 0
    %262 = vmatprep.subr.bf16.mxu0 0
    %263 = vmatpush1.bf16.xpose.msra.mxu0 0
    %264 = vmatprep.subr.bf16.mxu0 0
    %265 = vmatpush1.bf16.xpose.msra.mxu0 0
    %266 = vmatprep.subr.bf16.mxu0 0
    %267 = vmatpush1.bf16.xpose.msra.mxu0 0
    %268 = vmatprep.subr.bf16.mxu0 0
    %269 = vmatpush1.bf16.xpose.msra.mxu0 0
    %270 = vmatprep.subr.bf16.mxu0 0
    %271 = vmatpush1.bf16.xpose.msra.mxu0 0
    %272 = vmatprep.subr.bf16.mxu0 0
    %273 = vmatpush1.bf16.xpose.msra.mxu0 0
    %274 = vmatprep.subr.bf16.mxu0 0
    %275 = vmatpush1.bf16.xpose.msra.mxu0 0
    %276 = vmatprep.subr.bf16.mxu0 0
    %277 = vmatpush1.bf16.xpose.msra.mxu0 0
    %278 = vmatprep.mubr.bf16.mxu0 0
    %279 = vmatmul.mubr.bf16.gmra.mrb[0].mxu0 %v241
    %v280 = vpop.f32.mrb[0].mxu0
    %v281 = vadd.f32 0.0, %v280
    %v282 = vpop.f32.mrb[0].mxu0
    %v283 = vpop.f32.mrb[0].mxu0
    %v284 = vpop.f32.mrb[0].mxu0
    %285 = vdwg.mxu0
    %v286 = vsel %vm128, %v281, -inf
    %287 = vmax.xlane.f32.xlu0 %v286
    %v288 = vpop.xlane.xlu0 %287
    %v289 = vsub.f32 %v281, %v288
    %v290 = vmul.f32 %v289, 1.442695
    %v291 = vpow.pop %v290
    %v292 = vsel %vm128, %v291, 0.0
    %293 = vadd.xlane.f32.xlu0 %v292
    %v294 = vpop.xlane.xlu0 %293
    %v295 = vrcp.pop %v294
    %v296 = vmul.f32 %v291, %v295
    %v297 = vpack.c.bf16 %v296, %v296
    %298 = vrot.lane.b32.xlu0 %v124, 56
    %v299 = vpop.permute.xlu0 %298
    %v301 = vsel %vm128, %v297, 0
    %v304 = vsel %vm192, %v299, 0
    %306 = vmatprep.subr.bf16.mxu0 0
    %307 = vmatpush1.bf16.msra.mxu0 %v304
    %308 = vmatprep.subr.bf16.mxu0 0
    %309 = vmatpush1.bf16.msra.mxu0 0
    %310 = vmatprep.subr.bf16.mxu0 0
    %311 = vmatpush1.bf16.msra.mxu0 0
    %312 = vmatprep.subr.bf16.mxu0 0
    %313 = vmatpush1.bf16.msra.mxu0 0
    %314 = vmatprep.subr.bf16.mxu0 0
    %315 = vmatpush1.bf16.msra.mxu0 0
    %316 = vmatprep.subr.bf16.mxu0 0
    %317 = vmatpush1.bf16.msra.mxu0 0
    %318 = vmatprep.subr.bf16.mxu0 0
    %319 = vmatpush1.bf16.msra.mxu0 0
    %320 = vmatprep.subr.bf16.mxu0 0
    %321 = vmatpush1.bf16.msra.mxu0 0
    %322 = vmatprep.subr.bf16.mxu0 0
    %323 = vmatpush1.bf16.msra.mxu0 0
    %324 = vmatprep.subr.bf16.mxu0 0
    %325 = vmatpush1.bf16.msra.mxu0 0
    %326 = vmatprep.subr.bf16.mxu0 0
    %327 = vmatpush1.bf16.msra.mxu0 0
    %328 = vmatprep.subr.bf16.mxu0 0
    %329 = vmatpush1.bf16.msra.mxu0 0
    %330 = vmatprep.subr.bf16.mxu0 0
    %331 = vmatpush1.bf16.msra.mxu0 0
    %332 = vmatprep.subr.bf16.mxu0 0
    %333 = vmatpush1.bf16.msra.mxu0 0
    %334 = vmatprep.subr.bf16.mxu0 0
    %335 = vmatpush1.bf16.msra.mxu0 0
    %336 = vmatprep.subr.bf16.mxu0 0
    %337 = vmatpush1.bf16.msra.mxu0 0
    %338 = vmatprep.mubr.bf16.mxu0 0
    %339 = vmatmul.mubr.bf16.gmra.mrb[0].mxu0 %v301
    %v340 = vpop.f32.mrb[0].mxu0
    %v341 = vadd.f32 0.0, %v340
    %v342 = vpop.f32.mrb[0].mxu0
    %v343 = vpop.f32.mrb[0].mxu0
    %v344 = vpop.f32.mrb[0].mxu0
    %345 = vdwg.mxu0
    %346 = vrot.lane.b32.xlu0 %v124, 112
    %v347 = vpop.permute.xlu0 %346
    %348 = vrot.lane.b32.xlu0 %v124, 80
    %v349 = vpop.permute.xlu0 %348
    %v351 = vsel %vm128, %v347, 0
    %v354 = vsel %vm128, %v349, 0
    %356 = vmatprep.subr.bf16.mxu0 0
    %357 = vmatpush1.bf16.xpose.msra.mxu0 %v354
    %358 = vmatprep.subr.bf16.mxu0 0
    %359 = vmatpush1.bf16.xpose.msra.mxu0 0
    %360 = vmatprep.subr.bf16.mxu0 0
    %361 = vmatpush1.bf16.xpose.msra.mxu0 0
    %362 = vmatprep.subr.bf16.mxu0 0
    %363 = vmatpush1.bf16.xpose.msra.mxu0 0
    %364 = vmatprep.subr.bf16.mxu0 0
    %365 = vmatpush1.bf16.xpose.msra.mxu0 0
    %366 = vmatprep.subr.bf16.mxu0 0
    %367 = vmatpush1.bf16.xpose.msra.mxu0 0
    %368 = vmatprep.subr.bf16.mxu0 0
    %369 = vmatpush1.bf16.xpose.msra.mxu0 0
    %370 = vmatprep.subr.bf16.mxu0 0
    %371 = vmatpush1.bf16.xpose.msra.mxu0 0
    %372 = vmatprep.subr.bf16.mxu0 0
    %373 = vmatpush1.bf16.xpose.msra.mxu0 0
    %374 = vmatprep.subr.bf16.mxu0 0
    %375 = vmatpush1.bf16.xpose.msra.mxu0 0
    %376 = vmatprep.subr.bf16.mxu0 0
    %377 = vmatpush1.bf16.xpose.msra.mxu0 0
    %378 = vmatprep.subr.bf16.mxu0 0
    %379 = vmatpush1.bf16.xpose.msra.mxu0 0
    %380 = vmatprep.subr.bf16.mxu0 0
    %381 = vmatpush1.bf16.xpose.msra.mxu0 0
    %382 = vmatprep.subr.bf16.mxu0 0
    %383 = vmatpush1.bf16.xpose.msra.mxu0 0
    %384 = vmatprep.subr.bf16.mxu0 0
    %385 = vmatpush1.bf16.xpose.msra.mxu0 0
    %386 = vmatprep.subr.bf16.mxu0 0
    %387 = vmatpush1.bf16.xpose.msra.mxu0 0
    %388 = vmatprep.mubr.bf16.mxu0 0
    %389 = vmatmul.mubr.bf16.gmra.mrb[0].mxu0 %v351
    %v390 = vpop.f32.mrb[0].mxu0
    %v391 = vadd.f32 0.0, %v390
    %v392 = vpop.f32.mrb[0].mxu0
    %v393 = vpop.f32.mrb[0].mxu0
    %v394 = vpop.f32.mrb[0].mxu0
    %395 = vdwg.mxu0
    %v396 = vsel %vm128, %v391, -inf
    %397 = vmax.xlane.f32.xlu0 %v396
    %v398 = vpop.xlane.xlu0 %397
    %v399 = vsub.f32 %v391, %v398
    %v400 = vmul.f32 %v399, 1.442695
    %v401 = vpow.pop %v400
    %v402 = vsel %vm128, %v401, 0.0
    %403 = vadd.xlane.f32.xlu0 %v402
    %v404 = vpop.xlane.xlu0 %403
    %v405 = vrcp.pop %v404
    %v406 = vmul.f32 %v401, %v405
    %v407 = vpack.c.bf16 %v406, %v406
    %408 = vrot.lane.b32.xlu0 %v124, 48
    %v409 = vpop.permute.xlu0 %408
    %v411 = vsel %vm128, %v407, 0
    %v414 = vsel %vm192, %v409, 0
    %416 = vmatprep.subr.bf16.mxu0 0
    %417 = vmatpush1.bf16.msra.mxu0 %v414
    %418 = vmatprep.subr.bf16.mxu0 0
    %419 = vmatpush1.bf16.msra.mxu0 0
    %420 = vmatprep.subr.bf16.mxu0 0
    %421 = vmatpush1.bf16.msra.mxu0 0
    %422 = vmatprep.subr.bf16.mxu0 0
    %423 = vmatpush1.bf16.msra.mxu0 0
    %424 = vmatprep.subr.bf16.mxu0 0
    %425 = vmatpush1.bf16.msra.mxu0 0
    %426 = vmatprep.subr.bf16.mxu0 0
    %427 = vmatpush1.bf16.msra.mxu0 0
    %428 = vmatprep.subr.bf16.mxu0 0
    %429 = vmatpush1.bf16.msra.mxu0 0
    %430 = vmatprep.subr.bf16.mxu0 0
    %431 = vmatpush1.bf16.msra.mxu0 0
    %432 = vmatprep.subr.bf16.mxu0 0
    %433 = vmatpush1.bf16.msra.mxu0 0
    %434 = vmatprep.subr.bf16.mxu0 0
    %435 = vmatpush1.bf16.msra.mxu0 0
    %436 = vmatprep.subr.bf16.mxu0 0
    %437 = vmatpush1.bf16.msra.mxu0 0
    %438 = vmatprep.subr.bf16.mxu0 0
    %439 = vmatpush1.bf16.msra.mxu0 0
    %440 = vmatprep.subr.bf16.mxu0 0
    %441 = vmatpush1.bf16.msra.mxu0 0
    %442 = vmatprep.subr.bf16.mxu0 0
    %443 = vmatpush1.bf16.msra.mxu0 0
    %444 = vmatprep.subr.bf16.mxu0 0
    %445 = vmatpush1.bf16.msra.mxu0 0
    %446 = vmatprep.subr.bf16.mxu0 0
    %447 = vmatpush1.bf16.msra.mxu0 0
    %448 = vmatprep.mubr.bf16.mxu0 0
    %449 = vmatmul.mubr.bf16.gmra.mrb[0].mxu0 %v411
    %v450 = vpop.f32.mrb[0].mxu0
    %v451 = vadd.f32 0.0, %v450
    %v452 = vpop.f32.mrb[0].mxu0
    %v453 = vpop.f32.mrb[0].mxu0
    %v454 = vpop.f32.mrb[0].mxu0
    %455 = vdwg.mxu0
    %456 = vrot.lane.b32.xlu0 %v124, 104
    %v457 = vpop.permute.xlu0 %456
    %458 = vrot.lane.b32.xlu0 %v124, 72
    %v459 = vpop.permute.xlu0 %458
    %v461 = vsel %vm128, %v457, 0
    %v464 = vsel %vm128, %v459, 0
    %466 = vmatprep.subr.bf16.mxu0 0
    %467 = vmatpush1.bf16.xpose.msra.mxu0 %v464
    %468 = vmatprep.subr.bf16.mxu0 0
    %469 = vmatpush1.bf16.xpose.msra.mxu0 0
    %470 = vmatprep.subr.bf16.mxu0 0
    %471 = vmatpush1.bf16.xpose.msra.mxu0 0
    %472 = vmatprep.subr.bf16.mxu0 0
    %473 = vmatpush1.bf16.xpose.msra.mxu0 0
    %474 = vmatprep.subr.bf16.mxu0 0
    %475 = vmatpush1.bf16.xpose.msra.mxu0 0
    %476 = vmatprep.subr.bf16.mxu0 0
    %477 = vmatpush1.bf16.xpose.msra.mxu0 0
    %478 = vmatprep.subr.bf16.mxu0 0
    %479 = vmatpush1.bf16.xpose.msra.mxu0 0
    %480 = vmatprep.subr.bf16.mxu0 0
    %481 = vmatpush1.bf16.xpose.msra.mxu0 0
    %482 = vmatprep.subr.bf16.mxu0 0
    %483 = vmatpush1.bf16.xpose.msra.mxu0 0
    %484 = vmatprep.subr.bf16.mxu0 0
    %485 = vmatpush1.bf16.xpose.msra.mxu0 0
    %486 = vmatprep.subr.bf16.mxu0 0
    %487 = vmatpush1.bf16.xpose.msra.mxu0 0
    %488 = vmatprep.subr.bf16.mxu0 0
    %489 = vmatpush1.bf16.xpose.msra.mxu0 0
    %490 = vmatprep.subr.bf16.mxu0 0
    %491 = vmatpush1.bf16.xpose.msra.mxu0 0
    %492 = vmatprep.subr.bf16.mxu0 0
    %493 = vmatpush1.bf16.xpose.msra.mxu0 0
    %494 = vmatprep.subr.bf16.mxu0 0
    %495 = vmatpush1.bf16.xpose.msra.mxu0 0
    %496 = vmatprep.subr.bf16.mxu0 0
    %497 = vmatpush1.bf16.xpose.msra.mxu0 0
    %498 = vmatprep.mubr.bf16.mxu0 0
    %499 = vmatmul.mubr.bf16.gmra.mrb[0].mxu0 %v461
    %v500 = vpop.f32.mrb[0].mxu0
    %v501 = vadd.f32 0.0, %v500
    %v502 = vpop.f32.mrb[0].mxu0
    %v503 = vpop.f32.mrb[0].mxu0
    %v504 = vpop.f32.mrb[0].mxu0
    %505 = vdwg.mxu0
    %v506 = vsel %vm128, %v501, -inf
    %507 = vmax.xlane.f32.xlu0 %v506
    %v508 = vpop.xlane.xlu0 %507
    %v509 = vsub.f32 %v501, %v508
    %v510 = vmul.f32 %v509, 1.442695
    %v511 = vpow.pop %v510
    %v512 = vsel %vm128, %v511, 0.0
    %513 = vadd.xlane.f32.xlu0 %v512
    %v514 = vpop.xlane.xlu0 %513
    %v515 = vrcp.pop %v514
    %v516 = vmul.f32 %v511, %v515
    %v517 = vpack.c.bf16 %v516, %v516
    %518 = vrot.lane.b32.xlu0 %v124, 40
    %v519 = vpop.permute.xlu0 %518
    %v521 = vsel %vm128, %v517, 0
    %v524 = vsel %vm192, %v519, 0
    %526 = vmatprep.subr.bf16.mxu0 0
    %527 = vmatpush1.bf16.msra.mxu0 %v524
    %528 = vmatprep.subr.bf16.mxu0 0
    %529 = vmatpush1.bf16.msra.mxu0 0
    %530 = vmatprep.subr.bf16.mxu0 0
    %531 = vmatpush1.bf16.msra.mxu0 0
    %532 = vmatprep.subr.bf16.mxu0 0
    %533 = vmatpush1.bf16.msra.mxu0 0
    %534 = vmatprep.subr.bf16.mxu0 0
    %535 = vmatpush1.bf16.msra.mxu0 0
    %536 = vmatprep.subr.bf16.mxu0 0
    %537 = vmatpush1.bf16.msra.mxu0 0
    %538 = vmatprep.subr.bf16.mxu0 0
    %539 = vmatpush1.bf16.msra.mxu0 0
    %540 = vmatprep.subr.bf16.mxu0 0
    %541 = vmatpush1.bf16.msra.mxu0 0
    %542 = vmatprep.subr.bf16.mxu0 0
    %543 = vmatpush1.bf16.msra.mxu0 0
    %544 = vmatprep.subr.bf16.mxu0 0
    %545 = vmatpush1.bf16.msra.mxu0 0
    %546 = vmatprep.subr.bf16.mxu0 0
    %547 = vmatpush1.bf16.msra.mxu0 0
    %548 = vmatprep.subr.bf16.mxu0 0
    %549 = vmatpush1.bf16.msra.mxu0 0
    %550 = vmatprep.subr.bf16.mxu0 0
    %551 = vmatpush1.bf16.msra.mxu0 0
    %552 = vmatprep.subr.bf16.mxu0 0
    %553 = vmatpush1.bf16.msra.mxu0 0
    %554 = vmatprep.subr.bf16.mxu0 0
    %555 = vmatpush1.bf16.msra.mxu0 0
    %556 = vmatprep.subr.bf16.mxu0 0
    %557 = vmatpush1.bf16.msra.mxu0 0
    %558 = vmatprep.mubr.bf16.mxu0 0
    %559 = vmatmul.mubr.bf16.gmra.mrb[0].mxu0 %v521
    %v560 = vpop.f32.mrb[0].mxu0
    %v561 = vadd.f32 0.0, %v560
    %v562 = vpop.f32.mrb[0].mxu0
    %v563 = vpop.f32.mrb[0].mxu0
    %v564 = vpop.f32.mrb[0].mxu0
    %565 = vdwg.mxu0
    %567 = vrot.lane.b32.xlu0 %v341, 8
    %v568 = vpop.permute.xlu0 %567
    %571 = vrot.lane.b32.xlu0 %v451, 16
    %v572 = vpop.permute.xlu0 %571
    %575 = vrot.lane.b32.xlu0 %v561, 24
    %v576 = vpop.permute.xlu0 %575
    %v578 = vsel %vm128, %v231, %v568
    %vm579 = vcmask 130048
    %v580 = vsel %vm579, %v578, %v572
    %vm581 = vcmask 195584
    %v582 = vsel %vm581, %v580, %v576
    %v583 = vpack.c.bf16 %v121, %v121
    %585 = vrot.lane.b32.xlu0 %v583, 96
    %v586 = vpop.permute.xlu0 %585
    %v588 = vsel %vm128, %v583, 0
    %v591 = vsel %vm128, %v586, 0
    %593 = vmatprep.subr.bf16.mxu0 0
    %594 = vmatpush1.bf16.xpose.msra.mxu0 %v591
    %595 = vmatprep.subr.bf16.mxu0 0
    %596 = vmatpush1.bf16.xpose.msra.mxu0 0
    %597 = vmatprep.subr.bf16.mxu0 0
    %598 = vmatpush1.bf16.xpose.msra.mxu0 0
    %599 = vmatprep.subr.bf16.mxu0 0
    %600 = vmatpush1.bf16.xpose.msra.mxu0 0
    %601 = vmatprep.subr.bf16.mxu0 0
    %602 = vmatpush1.bf16.xpose.msra.mxu0 0
    %603 = vmatprep.subr.bf16.mxu0 0
    %604 = vmatpush1.bf16.xpose.msra.mxu0 0
    %605 = vmatprep.subr.bf16.mxu0 0
    %606 = vmatpush1.bf16.xpose.msra.mxu0 0
    %607 = vmatprep.subr.bf16.mxu0 0
    %608 = vmatpush1.bf16.xpose.msra.mxu0 0
    %609 = vmatprep.subr.bf16.mxu0 0
    %610 = vmatpush1.bf16.xpose.msra.mxu0 0
    %611 = vmatprep.subr.bf16.mxu0 0
    %612 = vmatpush1.bf16.xpose.msra.mxu0 0
    %613 = vmatprep.subr.bf16.mxu0 0
    %614 = vmatpush1.bf16.xpose.msra.mxu0 0
    %615 = vmatprep.subr.bf16.mxu0 0
    %616 = vmatpush1.bf16.xpose.msra.mxu0 0
    %617 = vmatprep.subr.bf16.mxu0 0
    %618 = vmatpush1.bf16.xpose.msra.mxu0 0
    %619 = vmatprep.subr.bf16.mxu0 0
    %620 = vmatpush1.bf16.xpose.msra.mxu0 0
    %621 = vmatprep.subr.bf16.mxu0 0
    %622 = vmatpush1.bf16.xpose.msra.mxu0 0
    %623 = vmatprep.subr.bf16.mxu0 0
    %624 = vmatpush1.bf16.xpose.msra.mxu0 0
    %625 = vmatprep.mubr.bf16.mxu0 0
    %626 = vmatmul.mubr.bf16.gmra.mrb[0].mxu0 %v588
    %v627 = vpop.f32.mrb[0].mxu0
    %v628 = vadd.f32 0.0, %v627
    %v629 = vpop.f32.mrb[0].mxu0
    %v630 = vpop.f32.mrb[0].mxu0
    %v631 = vpop.f32.mrb[0].mxu0
    %632 = vdwg.mxu0
    %v633 = vsel %vm128, %v628, -inf
    %634 = vmax.xlane.f32.xlu0 %v633
    %v635 = vpop.xlane.xlu0 %634
    %v636 = vsub.f32 %v628, %v635
    %v637 = vmul.f32 %v636, 1.442695
    %v638 = vpow.pop %v637
    %v639 = vsel %vm128, %v638, 0.0
    %640 = vadd.xlane.f32.xlu0 %v639
    %v641 = vpop.xlane.xlu0 %640
    %v642 = vrcp.pop %v641
    %v643 = vmul.f32 %v638, %v642
    %v644 = vpack.c.bf16 %v643, %v643
    %645 = vrot.lane.b32.xlu0 %v583, 64
    %v646 = vpop.permute.xlu0 %645
    %v648 = vsel %vm128, %v644, 0
    %v651 = vsel %vm192, %v646, 0
    %653 = vmatprep.subr.bf16.mxu0 0
    %654 = vmatpush1.bf16.msra.mxu0 %v651
    %655 = vmatprep.subr.bf16.mxu0 0
    %656 = vmatpush1.bf16.msra.mxu0 0
    %657 = vmatprep.subr.bf16.mxu0 0
    %658 = vmatpush1.bf16.msra.mxu0 0
    %659 = vmatprep.subr.bf16.mxu0 0
    %660 = vmatpush1.bf16.msra.mxu0 0
    %661 = vmatprep.subr.bf16.mxu0 0
    %662 = vmatpush1.bf16.msra.mxu0 0
    %663 = vmatprep.subr.bf16.mxu0 0
    %664 = vmatpush1.bf16.msra.mxu0 0
    %665 = vmatprep.subr.bf16.mxu0 0
    %666 = vmatpush1.bf16.msra.mxu0 0
    %667 = vmatprep.subr.bf16.mxu0 0
    %668 = vmatpush1.bf16.msra.mxu0 0
    %669 = vmatprep.subr.bf16.mxu0 0
    %670 = vmatpush1.bf16.msra.mxu0 0
    %671 = vmatprep.subr.bf16.mxu0 0
    %672 = vmatpush1.bf16.msra.mxu0 0
    %673 = vmatprep.subr.bf16.mxu0 0
    %674 = vmatpush1.bf16.msra.mxu0 0
    %675 = vmatprep.subr.bf16.mxu0 0
    %676 = vmatpush1.bf16.msra.mxu0 0
    %677 = vmatprep.subr.bf16.mxu0 0
    %678 = vmatpush1.bf16.msra.mxu0 0
    %679 = vmatprep.subr.bf16.mxu0 0
    %680 = vmatpush1.bf16.msra.mxu0 0
    %681 = vmatprep.subr.bf16.mxu0 0
    %682 = vmatpush1.bf16.msra.mxu0 0
    %683 = vmatprep.subr.bf16.mxu0 0
    %684 = vmatpush1.bf16.msra.mxu0 0
    %685 = vmatprep.mubr.bf16.mxu0 0
    %686 = vmatmul.mubr.bf16.gmra.mrb[0].mxu0 %v648
    %v687 = vpop.f32.mrb[0].mxu0
    %v688 = vadd.f32 0.0, %v687
    %v689 = vpop.f32.mrb[0].mxu0
    %v690 = vpop.f32.mrb[0].mxu0
    %v691 = vpop.f32.mrb[0].mxu0
    %692 = vdwg.mxu0
    %693 = vrot.lane.b32.xlu0 %v583, 120
    %v694 = vpop.permute.xlu0 %693
    %695 = vrot.lane.b32.xlu0 %v583, 88
    %v696 = vpop.permute.xlu0 %695
    %v698 = vsel %vm128, %v694, 0
    %v701 = vsel %vm128, %v696, 0
    %703 = vmatprep.subr.bf16.mxu0 0
    %704 = vmatpush1.bf16.xpose.msra.mxu0 %v701
    %705 = vmatprep.subr.bf16.mxu0 0
    %706 = vmatpush1.bf16.xpose.msra.mxu0 0
    %707 = vmatprep.subr.bf16.mxu0 0
    %708 = vmatpush1.bf16.xpose.msra.mxu0 0
    %709 = vmatprep.subr.bf16.mxu0 0
    %710 = vmatpush1.bf16.xpose.msra.mxu0 0
    %711 = vmatprep.subr.bf16.mxu0 0
    %712 = vmatpush1.bf16.xpose.msra.mxu0 0
    %713 = vmatprep.subr.bf16.mxu0 0
    %714 = vmatpush1.bf16.xpose.msra.mxu0 0
    %715 = vmatprep.subr.bf16.mxu0 0
    %716 = vmatpush1.bf16.xpose.msra.mxu0 0
    %717 = vmatprep.subr.bf16.mxu0 0
    %718 = vmatpush1.bf16.xpose.msra.mxu0 0
    %719 = vmatprep.subr.bf16.mxu0 0
    %720 = vmatpush1.bf16.xpose.msra.mxu0 0
    %721 = vmatprep.subr.bf16.mxu0 0
    %722 = vmatpush1.bf16.xpose.msra.mxu0 0
    %723 = vmatprep.subr.bf16.mxu0 0
    %724 = vmatpush1.bf16.xpose.msra.mxu0 0
    %725 = vmatprep.subr.bf16.mxu0 0
    %726 = vmatpush1.bf16.xpose.msra.mxu0 0
    %727 = vmatprep.subr.bf16.mxu0 0
    %728 = vmatpush1.bf16.xpose.msra.mxu0 0
    %729 = vmatprep.subr.bf16.mxu0 0
    %730 = vmatpush1.bf16.xpose.msra.mxu0 0
    %731 = vmatprep.subr.bf16.mxu0 0
    %732 = vmatpush1.bf16.xpose.msra.mxu0 0
    %733 = vmatprep.subr.bf16.mxu0 0
    %734 = vmatpush1.bf16.xpose.msra.mxu0 0
    %735 = vmatprep.mubr.bf16.mxu0 0
    %736 = vmatmul.mubr.bf16.gmra.mrb[0].mxu0 %v698
    %v737 = vpop.f32.mrb[0].mxu0
    %v738 = vadd.f32 0.0, %v737
    %v739 = vpop.f32.mrb[0].mxu0
    %v740 = vpop.f32.mrb[0].mxu0
    %v741 = vpop.f32.mrb[0].mxu0
    %742 = vdwg.mxu0
    %v743 = vsel %vm128, %v738, -inf
    %744 = vmax.xlane.f32.xlu0 %v743
    %v745 = vpop.xlane.xlu0 %744
    %v746 = vsub.f32 %v738, %v745
    %v747 = vmul.f32 %v746, 1.442695
    %v748 = vpow.pop %v747
    %v749 = vsel %vm128, %v748, 0.0
    %750 = vadd.xlane.f32.xlu0 %v749
    %v751 = vpop.xlane.xlu0 %750
    %v752 = vrcp.pop %v751
    %v753 = vmul.f32 %v748, %v752
    %v754 = vpack.c.bf16 %v753, %v753
    %755 = vrot.lane.b32.xlu0 %v583, 56
    %v756 = vpop.permute.xlu0 %755
    %v758 = vsel %vm128, %v754, 0
    %v761 = vsel %vm192, %v756, 0
    %763 = vmatprep.subr.bf16.mxu0 0
    %764 = vmatpush1.bf16.msra.mxu0 %v761
    %765 = vmatprep.subr.bf16.mxu0 0
    %766 = vmatpush1.bf16.msra.mxu0 0
    %767 = vmatprep.subr.bf16.mxu0 0
    %768 = vmatpush1.bf16.msra.mxu0 0
    %769 = vmatprep.subr.bf16.mxu0 0
    %770 = vmatpush1.bf16.msra.mxu0 0
    %771 = vmatprep.subr.bf16.mxu0 0
    %772 = vmatpush1.bf16.msra.mxu0 0
    %773 = vmatprep.subr.bf16.mxu0 0
    %774 = vmatpush1.bf16.msra.mxu0 0
    %775 = vmatprep.subr.bf16.mxu0 0
    %776 = vmatpush1.bf16.msra.mxu0 0
    %777 = vmatprep.subr.bf16.mxu0 0
    %778 = vmatpush1.bf16.msra.mxu0 0
    %779 = vmatprep.subr.bf16.mxu0 0
    %780 = vmatpush1.bf16.msra.mxu0 0
    %781 = vmatprep.subr.bf16.mxu0 0
    %782 = vmatpush1.bf16.msra.mxu0 0
    %783 = vmatprep.subr.bf16.mxu0 0
    %784 = vmatpush1.bf16.msra.mxu0 0
    %785 = vmatprep.subr.bf16.mxu0 0
    %786 = vmatpush1.bf16.msra.mxu0 0
    %787 = vmatprep.subr.bf16.mxu0 0
    %788 = vmatpush1.bf16.msra.mxu0 0
    %789 = vmatprep.subr.bf16.mxu0 0
    %790 = vmatpush1.bf16.msra.mxu0 0
    %791 = vmatprep.subr.bf16.mxu0 0
    %792 = vmatpush1.bf16.msra.mxu0 0
    %793 = vmatprep.subr.bf16.mxu0 0
    %794 = vmatpush1.bf16.msra.mxu0 0
    %795 = vmatprep.mubr.bf16.mxu0 0
    %796 = vmatmul.mubr.bf16.gmra.mrb[0].mxu0 %v758
    %v797 = vpop.f32.mrb[0].mxu0
    %v798 = vadd.f32 0.0, %v797
    %v799 = vpop.f32.mrb[0].mxu0
    %v800 = vpop.f32.mrb[0].mxu0
    %v801 = vpop.f32.mrb[0].mxu0
    %802 = vdwg.mxu0
    %803 = vrot.lane.b32.xlu0 %v583, 112
    %v804 = vpop.permute.xlu0 %803
    %805 = vrot.lane.b32.xlu0 %v583, 80
    %v806 = vpop.permute.xlu0 %805
    %v808 = vsel %vm128, %v804, 0
    %v811 = vsel %vm128, %v806, 0
    %813 = vmatprep.subr.bf16.mxu0 0
    %814 = vmatpush1.bf16.xpose.msra.mxu0 %v811
    %815 = vmatprep.subr.bf16.mxu0 0
    %816 = vmatpush1.bf16.xpose.msra.mxu0 0
    %817 = vmatprep.subr.bf16.mxu0 0
    %818 = vmatpush1.bf16.xpose.msra.mxu0 0
    %819 = vmatprep.subr.bf16.mxu0 0
    %820 = vmatpush1.bf16.xpose.msra.mxu0 0
    %821 = vmatprep.subr.bf16.mxu0 0
    %822 = vmatpush1.bf16.xpose.msra.mxu0 0
    %823 = vmatprep.subr.bf16.mxu0 0
    %824 = vmatpush1.bf16.xpose.msra.mxu0 0
    %825 = vmatprep.subr.bf16.mxu0 0
    %826 = vmatpush1.bf16.xpose.msra.mxu0 0
    %827 = vmatprep.subr.bf16.mxu0 0
    %828 = vmatpush1.bf16.xpose.msra.mxu0 0
    %829 = vmatprep.subr.bf16.mxu0 0
    %830 = vmatpush1.bf16.xpose.msra.mxu0 0
    %831 = vmatprep.subr.bf16.mxu0 0
    %832 = vmatpush1.bf16.xpose.msra.mxu0 0
    %833 = vmatprep.subr.bf16.mxu0 0
    %834 = vmatpush1.bf16.xpose.msra.mxu0 0
    %835 = vmatprep.subr.bf16.mxu0 0
    %836 = vmatpush1.bf16.xpose.msra.mxu0 0
    %837 = vmatprep.subr.bf16.mxu0 0
    %838 = vmatpush1.bf16.xpose.msra.mxu0 0
    %839 = vmatprep.subr.bf16.mxu0 0
    %840 = vmatpush1.bf16.xpose.msra.mxu0 0
    %841 = vmatprep.subr.bf16.mxu0 0
    %842 = vmatpush1.bf16.xpose.msra.mxu0 0
    %843 = vmatprep.subr.bf16.mxu0 0
    %844 = vmatpush1.bf16.xpose.msra.mxu0 0
    %845 = vmatprep.mubr.bf16.mxu0 0
    %846 = vmatmul.mubr.bf16.gmra.mrb[0].mxu0 %v808
    %v847 = vpop.f32.mrb[0].mxu0
    %v848 = vadd.f32 0.0, %v847
    %v849 = vpop.f32.mrb[0].mxu0
    %v850 = vpop.f32.mrb[0].mxu0
    %v851 = vpop.f32.mrb[0].mxu0
    %852 = vdwg.mxu0
    %v853 = vsel %vm128, %v848, -inf
    %854 = vmax.xlane.f32.xlu0 %v853
    %v855 = vpop.xlane.xlu0 %854
    %v856 = vsub.f32 %v848, %v855
    %v857 = vmul.f32 %v856, 1.442695
    %v858 = vpow.pop %v857
    %v859 = vsel %vm128, %v858, 0.0
    %860 = vadd.xlane.f32.xlu0 %v859
    %v861 = vpop.xlane.xlu0 %860
    %v862 = vrcp.pop %v861
    %v863 = vmul.f32 %v858, %v862
    %v864 = vpack.c.bf16 %v863, %v863
    %865 = vrot.lane.b32.xlu0 %v583, 48
    %v866 = vpop.permute.xlu0 %865
    %v868 = vsel %vm128, %v864, 0
    %v871 = vsel %vm192, %v866, 0
    %873 = vmatprep.subr.bf16.mxu0 0
    %874 = vmatpush1.bf16.msra.mxu0 %v871
    %875 = vmatprep.subr.bf16.mxu0 0
    %876 = vmatpush1.bf16.msra.mxu0 0
    %877 = vmatprep.subr.bf16.mxu0 0
    %878 = vmatpush1.bf16.msra.mxu0 0
    %879 = vmatprep.subr.bf16.mxu0 0
    %880 = vmatpush1.bf16.msra.mxu0 0
    %881 = vmatprep.subr.bf16.mxu0 0
    %882 = vmatpush1.bf16.msra.mxu0 0
    %883 = vmatprep.subr.bf16.mxu0 0
    %884 = vmatpush1.bf16.msra.mxu0 0
    %885 = vmatprep.subr.bf16.mxu0 0
    %886 = vmatpush1.bf16.msra.mxu0 0
    %887 = vmatprep.subr.bf16.mxu0 0
    %888 = vmatpush1.bf16.msra.mxu0 0
    %889 = vmatprep.subr.bf16.mxu0 0
    %890 = vmatpush1.bf16.msra.mxu0 0
    %891 = vmatprep.subr.bf16.mxu0 0
    %892 = vmatpush1.bf16.msra.mxu0 0
    %893 = vmatprep.subr.bf16.mxu0 0
    %894 = vmatpush1.bf16.msra.mxu0 0
    %895 = vmatprep.subr.bf16.mxu0 0
    %896 = vmatpush1.bf16.msra.mxu0 0
    %897 = vmatprep.subr.bf16.mxu0 0
    %898 = vmatpush1.bf16.msra.mxu0 0
    %899 = vmatprep.subr.bf16.mxu0 0
    %900 = vmatpush1.bf16.msra.mxu0 0
    %901 = vmatprep.subr.bf16.mxu0 0
    %902 = vmatpush1.bf16.msra.mxu0 0
    %903 = vmatprep.subr.bf16.mxu0 0
    %904 = vmatpush1.bf16.msra.mxu0 0
    %905 = vmatprep.mubr.bf16.mxu0 0
    %906 = vmatmul.mubr.bf16.gmra.mrb[0].mxu0 %v868
    %v907 = vpop.f32.mrb[0].mxu0
    %v908 = vadd.f32 0.0, %v907
    %v909 = vpop.f32.mrb[0].mxu0
    %v910 = vpop.f32.mrb[0].mxu0
    %v911 = vpop.f32.mrb[0].mxu0
    %912 = vdwg.mxu0
    %913 = vrot.lane.b32.xlu0 %v583, 104
    %v914 = vpop.permute.xlu0 %913
    %915 = vrot.lane.b32.xlu0 %v583, 72
    %v916 = vpop.permute.xlu0 %915
    %v918 = vsel %vm128, %v914, 0
    %v921 = vsel %vm128, %v916, 0
    %923 = vmatprep.subr.bf16.mxu0 0
    %924 = vmatpush1.bf16.xpose.msra.mxu0 %v921
    %925 = vmatprep.subr.bf16.mxu0 0
    %926 = vmatpush1.bf16.xpose.msra.mxu0 0
    %927 = vmatprep.subr.bf16.mxu0 0
    %928 = vmatpush1.bf16.xpose.msra.mxu0 0
    %929 = vmatprep.subr.bf16.mxu0 0
    %930 = vmatpush1.bf16.xpose.msra.mxu0 0
    %931 = vmatprep.subr.bf16.mxu0 0
    %932 = vmatpush1.bf16.xpose.msra.mxu0 0
    %933 = vmatprep.subr.bf16.mxu0 0
    %934 = vmatpush1.bf16.xpose.msra.mxu0 0
    %935 = vmatprep.subr.bf16.mxu0 0
    %936 = vmatpush1.bf16.xpose.msra.mxu0 0
    %937 = vmatprep.subr.bf16.mxu0 0
    %938 = vmatpush1.bf16.xpose.msra.mxu0 0
    %939 = vmatprep.subr.bf16.mxu0 0
    %940 = vmatpush1.bf16.xpose.msra.mxu0 0
    %941 = vmatprep.subr.bf16.mxu0 0
    %942 = vmatpush1.bf16.xpose.msra.mxu0 0
    %943 = vmatprep.subr.bf16.mxu0 0
    %944 = vmatpush1.bf16.xpose.msra.mxu0 0
    %945 = vmatprep.subr.bf16.mxu0 0
    %946 = vmatpush1.bf16.xpose.msra.mxu0 0
    %947 = vmatprep.subr.bf16.mxu0 0
    %948 = vmatpush1.bf16.xpose.msra.mxu0 0
    %949 = vmatprep.subr.bf16.mxu0 0
    %950 = vmatpush1.bf16.xpose.msra.mxu0 0
    %951 = vmatprep.subr.bf16.mxu0 0
    %952 = vmatpush1.bf16.xpose.msra.mxu0 0
    %953 = vmatprep.subr.bf16.mxu0 0
    %954 = vmatpush1.bf16.xpose.msra.mxu0 0
    %955 = vmatprep.mubr.bf16.mxu0 0
    %956 = vmatmul.mubr.bf16.gmra.mrb[0].mxu0 %v918
    %v957 = vpop.f32.mrb[0].mxu0
    %v958 = vadd.f32 0.0, %v957
    %v959 = vpop.f32.mrb[0].mxu0
    %v960 = vpop.f32.mrb[0].mxu0
    %v961 = vpop.f32.mrb[0].mxu0
    %962 = vdwg.mxu0
    %v963 = vsel %vm128, %v958, -inf
    %964 = vmax.xlane.f32.xlu0 %v963
    %v965 = vpop.xlane.xlu0 %964
    %v966 = vsub.f32 %v958, %v965
    %v967 = vmul.f32 %v966, 1.442695
    %v968 = vpow.pop %v967
    %v969 = vsel %vm128, %v968, 0.0
    %970 = vadd.xlane.f32.xlu0 %v969
    %v971 = vpop.xlane.xlu0 %970
    %v972 = vrcp.pop %v971
    %v973 = vmul.f32 %v968, %v972
    %v974 = vpack.c.bf16 %v973, %v973
    %975 = vrot.lane.b32.xlu0 %v583, 40
    %v976 = vpop.permute.xlu0 %975
    %v978 = vsel %vm128, %v974, 0
    %v981 = vsel %vm192, %v976, 0
    %983 = vmatprep.subr.bf16.mxu0 0
    %984 = vmatpush1.bf16.msra.mxu0 %v981
    %985 = vmatprep.subr.bf16.mxu0 0
    %986 = vmatpush1.bf16.msra.mxu0 0
    %987 = vmatprep.subr.bf16.mxu0 0
    %988 = vmatpush1.bf16.msra.mxu0 0
    %989 = vmatprep.subr.bf16.mxu0 0
    %990 = vmatpush1.bf16.msra.mxu0 0
    %991 = vmatprep.subr.bf16.mxu0 0
    %992 = vmatpush1.bf16.msra.mxu0 0
    %993 = vmatprep.subr.bf16.mxu0 0
    %994 = vmatpush1.bf16.msra.mxu0 0
    %995 = vmatprep.subr.bf16.mxu0 0
    %996 = vmatpush1.bf16.msra.mxu0 0
    %997 = vmatprep.subr.bf16.mxu0 0
    %998 = vmatpush1.bf16.msra.mxu0 0
    %999 = vmatprep.subr.bf16.mxu0 0
    %1000 = vmatpush1.bf16.msra.mxu0 0
    %1001 = vmatprep.subr.bf16.mxu0 0
    %1002 = vmatpush1.bf16.msra.mxu0 0
    %1003 = vmatprep.subr.bf16.mxu0 0
    %1004 = vmatpush1.bf16.msra.mxu0 0
    %1005 = vmatprep.subr.bf16.mxu0 0
    %1006 = vmatpush1.bf16.msra.mxu0 0
    %1007 = vmatprep.subr.bf16.mxu0 0
    %1008 = vmatpush1.bf16.msra.mxu0 0
    %1009 = vmatprep.subr.bf16.mxu0 0
    %1010 = vmatpush1.bf16.msra.mxu0 0
    %1011 = vmatprep.subr.bf16.mxu0 0
    %1012 = vmatpush1.bf16.msra.mxu0 0
    %1013 = vmatprep.subr.bf16.mxu0 0
    %1014 = vmatpush1.bf16.msra.mxu0 0
    %1015 = vmatprep.mubr.bf16.mxu0 0
    %1016 = vmatmul.mubr.bf16.gmra.mrb[0].mxu0 %v978
    %v1017 = vpop.f32.mrb[0].mxu0
    %v1018 = vadd.f32 0.0, %v1017
    %v1019 = vpop.f32.mrb[0].mxu0
    %v1020 = vpop.f32.mrb[0].mxu0
    %v1021 = vpop.f32.mrb[0].mxu0
    %1022 = vdwg.mxu0
    %1024 = vrot.lane.b32.xlu0 %v798, 8
    %v1025 = vpop.permute.xlu0 %1024
    %1028 = vrot.lane.b32.xlu0 %v908, 16
    %v1029 = vpop.permute.xlu0 %1028
    %1032 = vrot.lane.b32.xlu0 %v1018, 24
    %v1033 = vpop.permute.xlu0 %1032
    %v1035 = vsel %vm128, %v688, %v1025
    %v1036 = vsel %vm579, %v1035, %v1029
    %v1037 = vsel %vm581, %v1036, %v1033
    %v1038 = vpack.c.bf16 %v1037, %v582
    %v1039 = vld [vmem:[#allocation7] sm:$0xf]
    %v1040 = vld [vmem:[#allocation7 + $0x4] sm:$0xf]
    %v1041 = vld [vmem:[#allocation7 + $0x8] sm:$0xf]
    %v1042 = vld [vmem:[#allocation7 + $0xc] sm:$0xf]
    %v1043 = vld [vmem:[%s3] sm:$0x1]
    %v1045 = vlaneseq
    %v1046 = vshrl.u32 %v1045, 7
    %v1047 = vsub.s32 0, %v1046
    %v1048 = vrot.slane %v1043, %v1047
    %v1054 = vunpack.c.l.b16 %v1039
    %v1055 = vunpack.c.l.b16 %v1040
    %v1056 = vunpack.c.l.b16 %v1041
    %v1057 = vunpack.c.l.b16 %v1042
    %v1058 = vpack.c.b16 %v1055, %v1054
    %v1059 = vpack.c.b16 %v1057, %v1056
    %v1063 = vsel %vm79, %v1038, 0
    %1065 = vmatprep.subr.bf16.mxu0 0
    %1066 = vmatpush1.bf16.msra.mxu0 %v1058
    %1067 = vmatprep.subr.bf16.mxu0 0
    %1068 = vmatpush1.bf16.msra.mxu0 %v1059
    %1069 = vmatprep.subr.bf16.mxu0 0
    %1070 = vmatpush1.bf16.msra.mxu0 0
    %1071 = vmatprep.subr.bf16.mxu0 0
    %1072 = vmatpush1.bf16.msra.mxu0 0
    %1073 = vmatprep.subr.bf16.mxu0 0
    %1074 = vmatpush1.bf16.msra.mxu0 0
    %1075 = vmatprep.subr.bf16.mxu0 0
    %1076 = vmatpush1.bf16.msra.mxu0 0
    %1077 = vmatprep.subr.bf16.mxu0 0
    %1078 = vmatpush1.bf16.msra.mxu0 0
    %1079 = vmatprep.subr.bf16.mxu0 0
    %1080 = vmatpush1.bf16.msra.mxu0 0
    %1081 = vmatprep.subr.bf16.mxu0 0
    %1082 = vmatpush1.bf16.msra.mxu0 0
    %1083 = vmatprep.subr.bf16.mxu0 0
    %1084 = vmatpush1.bf16.msra.mxu0 0
    %1085 = vmatprep.subr.bf16.mxu0 0
    %1086 = vmatpush1.bf16.msra.mxu0 0
    %1087 = vmatprep.subr.bf16.mxu0 0
    %1088 = vmatpush1.bf16.msra.mxu0 0
    %1089 = vmatprep.subr.bf16.mxu0 0
    %1090 = vmatpush1.bf16.msra.mxu0 0
    %1091 = vmatprep.subr.bf16.mxu0 0
    %1092 = vmatpush1.bf16.msra.mxu0 0
    %1093 = vmatprep.subr.bf16.mxu0 0
    %1094 = vmatpush1.bf16.msra.mxu0 0
    %1095 = vmatprep.subr.bf16.mxu0 0
    %1096 = vmatpush1.bf16.msra.mxu0 0
    %1097 = vmatprep.mubr.bf16.mxu0 0
    %1098 = vmatmul.mubr.bf16.gmra.mrb[0].mxu0 %v1063
    %v1099 = vpop.f32.mrb[0].mxu0
    %v1100 = vadd.f32 %v1048, %v1099
    %v1101 = vpop.f32.mrb[0].mxu0
    %v1102 = vpop.f32.mrb[0].mxu0
    %v1103 = vadd.f32 %v1048, %v1102
    %v1104 = vpop.f32.mrb[0].mxu0
    %1105 = vdwg.mxu0
    %1106 = vst.msk [vmem:[#allocation8] sm:$0xff] %vm79, %v1100
    %1107 = vst.msk [vmem:[#allocation8 + $0x8] sm:$0xff] %vm79, %v1103
    // Predicated region
    $region30: #{attention_pallas.1} parent=1 // pred_check
      _
    $region31: #{attention_pallas.1} parent=1 // pred_check_branch
      %1109 = sbr.rel (0) target = $region33
    $region32: #{attention_pallas.1} parent=1 // pred_region
      %s1111 = ssub.s32 256, 256
      %1112 = vsyncadd [#allocation4], %s1111
      %s1113 = sshll.u32 [#allocation8], 4
      %s1114 = int_to_ptr.vmem [resolvable:$true] %s1113
      %1119 = dma.vmem_to_hbm [thread:$0]  %s1114, 256, %s4, [#allocation4], 128, 128, 8
    $region33: #{attention_pallas.1} parent=1 // pred_fallthru
      _
    // Predicated region
    $region34: #{attention_pallas.1} parent=1 // pred_check
      _
    $region35: #{attention_pallas.1} parent=1 // pred_check_branch
      %1121 = sbr.rel (0) target = $region37
    $region36: #{attention_pallas.1} parent=1 // pred_region
      %1122 = dma.done [#allocation4], 256
    $region37: #{attention_pallas.1} parent=1 // pred_fallthru
      _
    %1123 = vsyncpa [#allocation3], 1
    %1124 = vsyncpa [#allocation6], 1
    %1125 = vsyncpa [#allocation4], 1

</llo_original>
